<compile_context>
chip_gen: v5e
topology: v5e:2x2
jax: 0.10.0
libtpu: 0.0.40
codegen_flags: <defaults>
</compile_context>

<pallas_src>
import jax
import jax.numpy as jnp
from jax.experimental import pallas as pl
from jax.experimental.pallas import tpu as pltpu


def _round_up(n, m):
    return ((n + m - 1) // m) * m


def sae_kernel(x_ref, w1_ref, b1_ref, w2_ref, b2_ref,
               w3_ref, b3_ref, w4_ref, b4_ref, o_ref):
    """One batch tile per grid step; weights/biases are VMEM-resident.

    x arrives in its HBM dtype (typically f32) and is cast to the compute
    dtype in-kernel.  Matmuls accumulate in f32 (preferred_element_type);
    bias add + sigmoid stay in f32 (safe on v5e, which lacks bf16 VPU/EUP).
    """
    cd = w1_ref.dtype
    x = x_ref[...].astype(cd)
    h = jax.nn.sigmoid(
        jnp.dot(x, w1_ref[...], preferred_element_type=jnp.float32) + b1_ref[...])
    h = jax.nn.sigmoid(
        jnp.dot(h.astype(cd), w2_ref[...], preferred_element_type=jnp.float32) + b2_ref[...])
    h = jax.nn.sigmoid(
        jnp.dot(h.astype(cd), w3_ref[...], preferred_element_type=jnp.float32) + b3_ref[...])
    out = (jnp.dot(h.astype(cd), w4_ref[...], preferred_element_type=jnp.float32)
           + b4_ref[...])
    o_ref[...] = out.astype(o_ref.dtype)


def sae_forward(x, params, *, tile_b=512, compute_dtype=jnp.bfloat16,
                out_dtype=None):
    """x: (B, nb_movies). params: (in, out) weights and (1, out) biases.

    Returns (B, nb_movies) in `out_dtype` (defaults to `compute_dtype`;
    pass out_dtype=jnp.float32 / compute_dtype=jnp.float32 for the exact
    PyTorch-matching path).
    """
    B, nb_movies = x.shape
    if out_dtype is None:
        out_dtype = compute_dtype
    in_bytes = jnp.dtype(x.dtype).itemsize
    cd_bytes = jnp.dtype(compute_dtype).itemsize
    out_bytes = jnp.dtype(out_dtype).itemsize

    # Weights in the compute dtype (tiny); biases stay f32.
    w1 = params["w1"].astype(compute_dtype)
    w2 = params["w2"].astype(compute_dtype)
    w3 = params["w3"].astype(compute_dtype)
    w4 = params["w4"].astype(compute_dtype)
    b1 = params["b1"].astype(jnp.float32)
    b2 = params["b2"].astype(jnp.float32)
    b3 = params["b3"].astype(jnp.float32)
    b4 = params["b4"].astype(jnp.float32)

    # --- Batch tiling ------------------------------------------------------
    # Native sublane tile: 16 rows if any 16-bit dtype is involved, else 8.
    sub = 16 if min(cd_bytes, out_bytes) < 4 else 8
    tb = max(sub, _round_up(min(tile_b, max(B, 1)), sub))
    # Prefer >=2 grid steps (feeds both TensorCores on v7x) when the batch
    # is large enough to split without extra padding waste.
    if _round_up(B, tb) // tb < 2 and B >= 2 * sub:
        tb = max(sub, _round_up(-(-B // 2), sub))
    b_pad = _round_up(B, tb)

    # Explicit zero-pad of batch-pad rows (keeps padded rows well-defined;
    # they are dropped after the kernel). No lane padding anywhere.
    if b_pad != B:
        x_in = jnp.pad(x, ((0, b_pad - B), (0, 0)))
    else:
        x_in = x
    grid = (b_pad // tb,)

    batch_spec = pl.BlockSpec((tb, nb_movies), lambda i: (i, 0))
    resident = lambda shape: pl.BlockSpec(shape, lambda i: (0, 0))

    weight_bytes = (w1.size + w2.size + w3.size + w4.size) * cd_bytes \
        + (b1.size + b2.size + b3.size + b4.size) * 4

    # Per-step VMEM budget: double-buffered x/out blocks + resident params
    # (+ their second buffer) + in-kernel temporaries (bf16 x copy, f32 acc).
    vmem_est = (2 * tb * nb_movies * (in_bytes + out_bytes)
                + 2 * weight_bytes
                + tb * nb_movies * (4 + cd_bytes))
    vmem_limit = int(min(max(vmem_est + (8 << 20), 32 << 20), 56 << 20))

    cost = pl.CostEstimate(
        flops=2 * b_pad * (nb_movies * 20 + 20 * 10 + 10 * 20 + 20 * nb_movies),
        transcendentals=b_pad * (20 + 10 + 20),
        bytes_accessed=b_pad * nb_movies * (in_bytes + out_bytes) + weight_bytes,
    )

    out = pl.pallas_call(
        sae_kernel,
        out_shape=jax.ShapeDtypeStruct((b_pad, nb_movies), out_dtype),
        grid=grid,
        in_specs=[
            batch_spec,
            resident(w1.shape), resident(b1.shape),
            resident(w2.shape), resident(b2.shape),
            resident(w3.shape), resident(b3.shape),
            resident(w4.shape), resident(b4.shape),
        ],
        out_specs=batch_spec,
        compiler_params=pltpu.CompilerParams(
            dimension_semantics=("parallel",),
            vmem_limit_bytes=vmem_limit),
        cost_estimate=cost,
    )(x_in, w1, b1, w2, b2, w3, b3, w4, b4)

    return out if b_pad == B else out[:B]


def init_params(key, nb_movies):
    """PyTorch nn.Linear default init: U(-1/sqrt(fan_in), +1/sqrt(fan_in))."""
    dims = [(nb_movies, 20), (20, 10), (10, 20), (20, nb_movies)]
    params = {}
    keys = jax.random.split(key, 2 * len(dims))
    for i, (fan_in, fan_out) in enumerate(dims):
        bound = 1.0 / jnp.sqrt(jnp.float32(fan_in))
        # stored as (in, out): kernel does x @ W  (== x @ W_pt.T in PyTorch)
        w = jax.random.uniform(keys[2 * i], (fan_in, fan_out),
                               minval=-bound, maxval=bound, dtype=jnp.float32)
        b = jax.random.uniform(keys[2 * i + 1], (1, fan_out),
                               minval=-bound, maxval=bound, dtype=jnp.float32)
        params[f"w{i + 1}"] = w
        params[f"b{i + 1}"] = b
    return params


def sae_reference(x, p, compute_dtype=jnp.float32):
    """Pure-JAX reference mirroring the kernel's dtype handling (f32 accum)."""
    cd = compute_dtype
    h = jax.nn.sigmoid(
        jnp.dot(x.astype(cd), p["w1"].astype(cd),
                preferred_element_type=jnp.float32) + p["b1"])
    h = jax.nn.sigmoid(
        jnp.dot(h.astype(cd), p["w2"].astype(cd),
                preferred_element_type=jnp.float32) + p["b2"])
    h = jax.nn.sigmoid(
        jnp.dot(h.astype(cd), p["w3"].astype(cd),
                preferred_element_type=jnp.float32) + p["b3"])
    return (jnp.dot(h.astype(cd), p["w4"].astype(cd),
                    preferred_element_type=jnp.float32) + p["b4"])


if __name__ == "__main__":
    # Small, deterministic demo shapes. nb_movies deliberately NOT a multiple
    # of 128 to exercise masked tail lane stores (real MovieLens is 1682).
    nb_movies = 200
    batch = 8

    key = jax.random.PRNGKey(0)
    k_params, k_x = jax.random.split(key)
    params = init_params(k_params, nb_movies)

    # Ratings-like input: values in [0, 5]
    x = jax.random.uniform(k_x, (batch, nb_movies), minval=0.0, maxval=5.0,
                           dtype=jnp.float32)

    # 1) Exact f32 path vs f32 reference (tight tolerance).
    out_f32 = jax.block_until_ready(
        sae_forward(x, params, compute_dtype=jnp.float32,
                    out_dtype=jnp.float32))
    ref_f32 = jax.block_until_ready(sae_reference(x, params, jnp.float32))
    assert out_f32.shape == (batch, nb_movies), out_f32.shape
    assert out_f32.dtype == jnp.float32
    assert jnp.allclose(out_f32, ref_f32, atol=1e-5, rtol=1e-5), \
        float(jnp.max(jnp.abs(out_f32 - ref_f32)))

    # 2) bf16 inference path (bf16 operands + bf16 output) vs matching
    #    bf16-operand reference rounded to bf16 (loose tolerance).
    out_bf16 = jax.block_until_ready(
        sae_forward(x, params, compute_dtype=jnp.bfloat16))
    ref_bf16 = jax.block_until_ready(
        sae_reference(x, params, jnp.bfloat16).astype(jnp.bfloat16))
    assert out_bf16.shape == (batch, nb_movies), out_bf16.shape
    assert out_bf16.dtype == jnp.bfloat16
    diff = jnp.abs(out_bf16.astype(jnp.float32) - ref_bf16.astype(jnp.float32))
    assert jnp.max(diff) < 2e-2, float(jnp.max(diff))

    print("KERNEL_OK")
</pallas_src>

<mosaic_0001>
module attributes {stable_mosaic.version = 11 : i64} {
  func.func @sae_kernel(%arg0: i32, %arg1: memref<8x200xf32, #tpu.memory_space<vmem>>, %arg2: memref<200x20xf32, #tpu.memory_space<vmem>>, %arg3: memref<1x20xf32, #tpu.memory_space<vmem>>, %arg4: memref<20x10xf32, #tpu.memory_space<vmem>>, %arg5: memref<1x10xf32, #tpu.memory_space<vmem>>, %arg6: memref<10x20xf32, #tpu.memory_space<vmem>>, %arg7: memref<1x20xf32, #tpu.memory_space<vmem>>, %arg8: memref<20x200xf32, #tpu.memory_space<vmem>>, %arg9: memref<1x200xf32, #tpu.memory_space<vmem>>, %arg10: memref<8x200xf32, #tpu.memory_space<vmem>>) attributes {dimension_semantics = [#tpu.dimension_semantics<parallel>], iteration_bounds = array<i64: 1>, scalar_prefetch = 0 : i64, scratch_operands = 0 : i64, tpu.core_type = #tpu.core_type<tc>, window_params = [{transform_indices = @transform_0, window_bounds = array<i64: 8, 200>}, {pipeline_mode = #tpu.pipeline_mode<synchronous>, transform_indices = @transform_1, window_bounds = array<i64: 200, 20>}, {pipeline_mode = #tpu.pipeline_mode<synchronous>, transform_indices = @transform_2, window_bounds = array<i64: 1, 20>}, {pipeline_mode = #tpu.pipeline_mode<synchronous>, transform_indices = @transform_3, window_bounds = array<i64: 20, 10>}, {pipeline_mode = #tpu.pipeline_mode<synchronous>, transform_indices = @transform_4, window_bounds = array<i64: 1, 10>}, {pipeline_mode = #tpu.pipeline_mode<synchronous>, transform_indices = @transform_5, window_bounds = array<i64: 10, 20>}, {pipeline_mode = #tpu.pipeline_mode<synchronous>, transform_indices = @transform_6, window_bounds = array<i64: 1, 20>}, {pipeline_mode = #tpu.pipeline_mode<synchronous>, transform_indices = @transform_7, window_bounds = array<i64: 20, 200>}, {pipeline_mode = #tpu.pipeline_mode<synchronous>, transform_indices = @transform_8, window_bounds = array<i64: 1, 200>}, {transform_indices = @transform_9, window_bounds = array<i64: 8, 200>}]} {
    %c0 = arith.constant 0 : index
    %c0_0 = arith.constant 0 : index
    %0 = vector.load %arg1[%c0, %c0_0] : memref<8x200xf32, #tpu.memory_space<vmem>>, vector<8x200xf32>
    %c0_1 = arith.constant 0 : index
    %c0_2 = arith.constant 0 : index
    %1 = vector.load %arg2[%c0_1, %c0_2] : memref<200x20xf32, #tpu.memory_space<vmem>>, vector<200x20xf32>
    %cst = arith.constant dense<0.000000e+00> : vector<8x20xf32>
    %2 = tpu.matmul %0, %1, %cst {dimension_numbers = #tpu.dot_dimension_numbers<[1], [0], [0], [1], [0, 0, 1, 1], [], []>} : vector<8x200xf32>, vector<200x20xf32>, vector<8x20xf32> -> vector<8x20xf32>
    %c0_3 = arith.constant 0 : index
    %c0_4 = arith.constant 0 : index
    %3 = vector.load %arg3[%c0_3, %c0_4] : memref<1x20xf32, #tpu.memory_space<vmem>>, vector<1x20xf32>
    %4 = vector.broadcast %3 : vector<1x20xf32> to vector<8x20xf32>
    %5 = arith.addf %2, %4 : vector<8x20xf32>
    %6 = arith.negf %5 : vector<8x20xf32>
    %7 = math.exp %6 : vector<8x20xf32>
    %cst_5 = arith.constant 1.000000e+00 : f32
    %8 = vector.broadcast %cst_5 : f32 to vector<8x20xf32>
    %9 = arith.addf %8, %7 : vector<8x20xf32>
    %10 = arith.divf %8, %9 : vector<8x20xf32>
    %c0_6 = arith.constant 0 : index
    %c0_7 = arith.constant 0 : index
    %11 = vector.load %arg4[%c0_6, %c0_7] : memref<20x10xf32, #tpu.memory_space<vmem>>, vector<20x10xf32>
    %cst_8 = arith.constant dense<0.000000e+00> : vector<8x10xf32>
    %12 = tpu.matmul %10, %11, %cst_8 {dimension_numbers = #tpu.dot_dimension_numbers<[1], [0], [0], [1], [0, 0, 1, 1], [], []>} : vector<8x20xf32>, vector<20x10xf32>, vector<8x10xf32> -> vector<8x10xf32>
    %c0_9 = arith.constant 0 : index
    %c0_10 = arith.constant 0 : index
    %13 = vector.load %arg5[%c0_9, %c0_10] : memref<1x10xf32, #tpu.memory_space<vmem>>, vector<1x10xf32>
    %14 = vector.broadcast %13 : vector<1x10xf32> to vector<8x10xf32>
    %15 = arith.addf %12, %14 : vector<8x10xf32>
    %16 = arith.negf %15 : vector<8x10xf32>
    %17 = math.exp %16 : vector<8x10xf32>
    %cst_11 = arith.constant 1.000000e+00 : f32
    %18 = vector.broadcast %cst_11 : f32 to vector<8x10xf32>
    %19 = arith.addf %18, %17 : vector<8x10xf32>
    %20 = arith.divf %18, %19 : vector<8x10xf32>
    %c0_12 = arith.constant 0 : index
    %c0_13 = arith.constant 0 : index
    %21 = vector.load %arg6[%c0_12, %c0_13] : memref<10x20xf32, #tpu.memory_space<vmem>>, vector<10x20xf32>
    %cst_14 = arith.constant dense<0.000000e+00> : vector<8x20xf32>
    %22 = tpu.matmul %20, %21, %cst_14 {dimension_numbers = #tpu.dot_dimension_numbers<[1], [0], [0], [1], [0, 0, 1, 1], [], []>} : vector<8x10xf32>, vector<10x20xf32>, vector<8x20xf32> -> vector<8x20xf32>
    %c0_15 = arith.constant 0 : index
    %c0_16 = arith.constant 0 : index
    %23 = vector.load %arg7[%c0_15, %c0_16] : memref<1x20xf32, #tpu.memory_space<vmem>>, vector<1x20xf32>
    %24 = vector.broadcast %23 : vector<1x20xf32> to vector<8x20xf32>
    %25 = arith.addf %22, %24 : vector<8x20xf32>
    %26 = arith.negf %25 : vector<8x20xf32>
    %27 = math.exp %26 : vector<8x20xf32>
    %cst_17 = arith.constant 1.000000e+00 : f32
    %28 = vector.broadcast %cst_17 : f32 to vector<8x20xf32>
    %29 = arith.addf %28, %27 : vector<8x20xf32>
    %30 = arith.divf %28, %29 : vector<8x20xf32>
    %c0_18 = arith.constant 0 : index
    %c0_19 = arith.constant 0 : index
    %31 = vector.load %arg8[%c0_18, %c0_19] : memref<20x200xf32, #tpu.memory_space<vmem>>, vector<20x200xf32>
    %cst_20 = arith.constant dense<0.000000e+00> : vector<8x200xf32>
    %32 = tpu.matmul %30, %31, %cst_20 {dimension_numbers = #tpu.dot_dimension_numbers<[1], [0], [0], [1], [0, 0, 1, 1], [], []>} : vector<8x20xf32>, vector<20x200xf32>, vector<8x200xf32> -> vector<8x200xf32>
    %c0_21 = arith.constant 0 : index
    %c0_22 = arith.constant 0 : index
    %33 = vector.load %arg9[%c0_21, %c0_22] : memref<1x200xf32, #tpu.memory_space<vmem>>, vector<1x200xf32>
    %34 = vector.broadcast %33 : vector<1x200xf32> to vector<8x200xf32>
    %35 = arith.addf %32, %34 : vector<8x200xf32>
    %c0_23 = arith.constant 0 : index
    %c0_24 = arith.constant 0 : index
    %36 = vector.load %arg10[%c0_23, %c0_24] : memref<8x200xf32, #tpu.memory_space<vmem>>, vector<8x200xf32>
    tpu.vector_store %arg10[%c0_23, %c0_24], %35 {strides = array<i32>} : memref<8x200xf32, #tpu.memory_space<vmem>>, vector<8x200xf32>,
    return
  }
  func.func @transform_0(%arg0: i32) -> (i32, i32) {
    %c0_i32 = arith.constant 0 : i32
    %c0_i32_0 = arith.constant 0 : i32
    return %arg0, %c0_i32 : i32, i32
  }
  func.func @transform_1(%arg0: i32) -> (i32, i32) {
    %c0_i32 = arith.constant 0 : i32
    %c0_i32_0 = arith.constant 0 : i32
    %c0_i32_1 = arith.constant 0 : i32
    return %c0_i32, %c0_i32_0 : i32, i32
  }
  func.func @transform_2(%arg0: i32) -> (i32, i32) {
    %c0_i32 = arith.constant 0 : i32
    %c0_i32_0 = arith.constant 0 : i32
    %c0_i32_1 = arith.constant 0 : i32
    return %c0_i32, %c0_i32_0 : i32, i32
  }
  func.func @transform_3(%arg0: i32) -> (i32, i32) {
    %c0_i32 = arith.constant 0 : i32
    %c0_i32_0 = arith.constant 0 : i32
    %c0_i32_1 = arith.constant 0 : i32
    return %c0_i32, %c0_i32_0 : i32, i32
  }
  func.func @transform_4(%arg0: i32) -> (i32, i32) {
    %c0_i32 = arith.constant 0 : i32
    %c0_i32_0 = arith.constant 0 : i32
    %c0_i32_1 = arith.constant 0 : i32
    return %c0_i32, %c0_i32_0 : i32, i32
  }
  func.func @transform_5(%arg0: i32) -> (i32, i32) {
    %c0_i32 = arith.constant 0 : i32
    %c0_i32_0 = arith.constant 0 : i32
    %c0_i32_1 = arith.constant 0 : i32
    return %c0_i32, %c0_i32_0 : i32, i32
  }
  func.func @transform_6(%arg0: i32) -> (i32, i32) {
    %c0_i32 = arith.constant 0 : i32
    %c0_i32_0 = arith.constant 0 : i32
    %c0_i32_1 = arith.constant 0 : i32
    return %c0_i32, %c0_i32_0 : i32, i32
  }
  func.func @transform_7(%arg0: i32) -> (i32, i32) {
    %c0_i32 = arith.constant 0 : i32
    %c0_i32_0 = arith.constant 0 : i32
    %c0_i32_1 = arith.constant 0 : i32
    return %c0_i32, %c0_i32_0 : i32, i32
  }
  func.func @transform_8(%arg0: i32) -> (i32, i32) {
    %c0_i32 = arith.constant 0 : i32
    %c0_i32_0 = arith.constant 0 : i32
    %c0_i32_1 = arith.constant 0 : i32
    return %c0_i32, %c0_i32_0 : i32, i32
  }
  func.func @transform_9(%arg0: i32) -> (i32, i32) {
    %c0_i32 = arith.constant 0 : i32
    %c0_i32_0 = arith.constant 0 : i32
    return %arg0, %c0_i32 : i32, i32
  }
}

</mosaic_0001>

<llo_original>
// kernel: tpu_custom_call.1
$region0: #{tpu_custom_call.1}
  #allocation0 [shape = 'u32[]', space=smem, size = 0x4, offset = 0x4, fixed_abs, tag = 'smem constant byte address 0x4 - core index']
  #allocation1 [shape = 'u32[72,128]{1,0:T(1,128)}', space=vmem, size = 0x9000, scoped, tag = 'internal scratch']
  %s0 = inlined_call_operand.vmem [shape: f32[8,200], index: 0, kind: input, shape index: {}]
  %s1 = inlined_call_operand.vmem [shape: f32[200,20], index: 1, kind: input, shape index: {}]
  %s2 = inlined_call_operand.vmem [shape: f32[1,20], index: 2, kind: input, shape index: {}]
  %s3 = inlined_call_operand.vmem [shape: f32[20,10], index: 3, kind: input, shape index: {}]
  %s4 = inlined_call_operand.vmem [shape: f32[1,10], index: 4, kind: input, shape index: {}]
  %s5 = inlined_call_operand.vmem [shape: f32[10,20], index: 5, kind: input, shape index: {}]
  %s6 = inlined_call_operand.vmem [shape: f32[1,20], index: 6, kind: input, shape index: {}]
  %s7 = inlined_call_operand.vmem [shape: f32[20,200], index: 7, kind: input, shape index: {}]
  %s8 = inlined_call_operand.vmem [shape: f32[1,200], index: 8, kind: input, shape index: {}]
  %s9 = inlined_call_operand.hbm [shape: f32[8,200], index: 9, kind: output, shape index: {}]
  %s10 = sld [smem:[#allocation0]]
  $region46: #{tpu_custom_call.1} parent=0
    _
  %s12 = ssub.s32 1, %s10
  %s13 = scalar_select 0, %s12, %s10
  $region1: #{tpu_custom_call.1} parent=0
    #allocation2 [shape = 'u8[8192]{0}', space=vmem, size = 0x2000, scoped, tag = 'output window, operand 0, single buffered']
    #allocation3 [shape = 's32[1]{0}', space=sflag, size = 0x4, scoped, tag = 'scoped memory for tpu_custom_call.1']
    %14 = vsyncpa [#allocation3], 0
    // Predicated region
    $region2: #{tpu_custom_call.1} parent=1 // pred_check
      _
    $region3: #{tpu_custom_call.1} parent=1 // pred_check_branch
      %16 = sbr.rel (0) target = $region5
    $region4: #{tpu_custom_call.1} parent=1 // pred_region
      _
    $region5: #{tpu_custom_call.1} parent=1 // pred_fallthru
      _
    // Predicated region
    $region6: #{tpu_custom_call.1} parent=1 // pred_check
      _
    $region7: #{tpu_custom_call.1} parent=1 // pred_check_branch
      %18 = sbr.rel (0) target = $region9
    $region8: #{tpu_custom_call.1} parent=1 // pred_region
      _
    $region9: #{tpu_custom_call.1} parent=1 // pred_fallthru
      _
    // Predicated region
    $region10: #{tpu_custom_call.1} parent=1 // pred_check
      _
    $region11: #{tpu_custom_call.1} parent=1 // pred_check_branch
      %20 = sbr.rel (0) target = $region13
    $region12: #{tpu_custom_call.1} parent=1 // pred_region
      _
    $region13: #{tpu_custom_call.1} parent=1 // pred_fallthru
      _
    // Predicated region
    $region14: #{tpu_custom_call.1} parent=1 // pred_check
      _
    $region15: #{tpu_custom_call.1} parent=1 // pred_check_branch
      %22 = sbr.rel (0) target = $region17
    $region16: #{tpu_custom_call.1} parent=1 // pred_region
      _
    $region17: #{tpu_custom_call.1} parent=1 // pred_fallthru
      _
    // Predicated region
    $region18: #{tpu_custom_call.1} parent=1 // pred_check
      _
    $region19: #{tpu_custom_call.1} parent=1 // pred_check_branch
      %24 = sbr.rel (0) target = $region21
    $region20: #{tpu_custom_call.1} parent=1 // pred_region
      _
    $region21: #{tpu_custom_call.1} parent=1 // pred_fallthru
      _
    // Predicated region
    $region22: #{tpu_custom_call.1} parent=1 // pred_check
      _
    $region23: #{tpu_custom_call.1} parent=1 // pred_check_branch
      %26 = sbr.rel (0) target = $region25
    $region24: #{tpu_custom_call.1} parent=1 // pred_region
      _
    $region25: #{tpu_custom_call.1} parent=1 // pred_fallthru
      _
    // Predicated region
    $region26: #{tpu_custom_call.1} parent=1 // pred_check
      _
    $region27: #{tpu_custom_call.1} parent=1 // pred_check_branch
      %28 = sbr.rel (0) target = $region29
    $region28: #{tpu_custom_call.1} parent=1 // pred_region
      _
    $region29: #{tpu_custom_call.1} parent=1 // pred_fallthru
      _
    // Predicated region
    $region30: #{tpu_custom_call.1} parent=1 // pred_check
      _
    $region31: #{tpu_custom_call.1} parent=1 // pred_check_branch
      %30 = sbr.rel (0) target = $region33
    $region32: #{tpu_custom_call.1} parent=1 // pred_region
      _
    $region33: #{tpu_custom_call.1} parent=1 // pred_fallthru
      _
    // Predicated region
    $region34: #{tpu_custom_call.1} parent=1 // pred_check
      _
    $region35: #{tpu_custom_call.1} parent=1 // pred_check_branch
      %32 = sbr.rel (0) target = $region37
    $region36: #{tpu_custom_call.1} parent=1 // pred_region
      _
    $region37: #{tpu_custom_call.1} parent=1 // pred_fallthru
      _
    %v33 = vld [vmem:[%s0] sm:$0xff]
    %v34 = vld [vmem:[%s0 + $0x8] sm:$0xff]
    %v35 = vld [vmem:[%s1] sm:$0xff]
    %v36 = vld [vmem:[%s1 + $0x8] sm:$0xff]
    %v37 = vld [vmem:[%s1 + $0x10] sm:$0xff]
    %v38 = vld [vmem:[%s1 + $0x18] sm:$0xff]
    %v39 = vld [vmem:[%s1 + $0x20] sm:$0xff]
    %v40 = vld [vmem:[%s1 + $0x28] sm:$0xff]
    %v41 = vld [vmem:[%s1 + $0x30] sm:$0xff]
    %v42 = vld [vmem:[%s1 + $0x38] sm:$0xff]
    %v43 = vld [vmem:[%s1 + $0x40] sm:$0xff]
    %v44 = vld [vmem:[%s1 + $0x48] sm:$0xff]
    %v45 = vld [vmem:[%s1 + $0x50] sm:$0xff]
    %v46 = vld [vmem:[%s1 + $0x58] sm:$0xff]
    %v47 = vld [vmem:[%s1 + $0x60] sm:$0xff]
    %v48 = vld [vmem:[%s1 + $0x68] sm:$0xff]
    %v49 = vld [vmem:[%s1 + $0x70] sm:$0xff]
    %v50 = vld [vmem:[%s1 + $0x78] sm:$0xff]
    %v51 = vld [vmem:[%s1 + $0x80] sm:$0xff]
    %v52 = vld [vmem:[%s1 + $0x88] sm:$0xff]
    %v53 = vld [vmem:[%s1 + $0x90] sm:$0xff]
    %v54 = vld [vmem:[%s1 + $0x98] sm:$0xff]
    %v55 = vld [vmem:[%s1 + $0xa0] sm:$0xff]
    %v56 = vld [vmem:[%s1 + $0xa8] sm:$0xff]
    %v57 = vld [vmem:[%s1 + $0xb0] sm:$0xff]
    %v58 = vld [vmem:[%s1 + $0xb8] sm:$0xff]
    %v59 = vld [vmem:[%s1 + $0xc0] sm:$0xff]
    %v60 = vld [vmem:[%s2] sm:$0x1]
    %v62 = vperm.slane %v60, 0
    %vm64 = vcmask 588800
    %v66 = vsel %vm64, %v34, 0
    %68 = vmatpush.msra.mxu0 %v50
    %69 = vmatpush.msra.mxu0 %v49
    %70 = vmatpush.msra.mxu0 %v48
    %71 = vmatpush.msra.mxu0 %v47
    %72 = vmatpush.msra.mxu0 %v46
    %73 = vmatpush.msra.mxu0 %v45
    %74 = vmatpush.msra.mxu0 %v44
    %75 = vmatpush.msra.mxu0 %v43
    %76 = vmatpush.msra.mxu0 %v42
    %77 = vmatpush.msra.mxu0 %v41
    %78 = vmatpush.msra.mxu0 %v40
    %79 = vmatpush.msra.mxu0 %v39
    %80 = vmatpush.msra.mxu0 %v38
    %81 = vmatpush.msra.mxu0 %v37
    %82 = vmatpush.msra.mxu0 %v36
    %83 = vmatpush.msra.mxu0 %v35
    %84 = vmatmul.f32.gmra.mxu0 %v33
    %v85 = vpop.f32.mrf.mxu0
    %v86 = vadd.f32 %v62, %v85
    %87 = vdwg.mxu0
    %88 = vmatpush.msra.mxu0 0.0
    %89 = vmatpush.msra.mxu0 0.0
    %90 = vmatpush.msra.mxu0 0.0
    %91 = vmatpush.msra.mxu0 0.0
    %92 = vmatpush.msra.mxu0 0.0
    %93 = vmatpush.msra.mxu0 0.0
    %94 = vmatpush.msra.mxu0 0.0
    %95 = vmatpush.msra.mxu0 %v59
    %96 = vmatpush.msra.mxu0 %v58
    %97 = vmatpush.msra.mxu0 %v57
    %98 = vmatpush.msra.mxu0 %v56
    %99 = vmatpush.msra.mxu0 %v55
    %100 = vmatpush.msra.mxu0 %v54
    %101 = vmatpush.msra.mxu0 %v53
    %102 = vmatpush.msra.mxu0 %v52
    %103 = vmatpush.msra.mxu0 %v51
    %104 = vmatmul.f32.gmra.mxu0 %v66
    %v105 = vpop.f32.mrf.mxu0
    %v106 = vadd.f32 %v86, %v105
    %107 = vdwg.mxu0
    %v108 = vxor.u32 %v106, 2147483648
    %v109 = vmul.f32 %v108, 1.442695
    %v110 = vpow.pop %v109
    %v111 = vadd.f32 %v110, 1.0
    %v112 = vrcp.pop %v111
    %v113 = vmul.f32 %v111, %v112
    %v114 = vsub.f32 1.0, %v113
    %v115 = vmul.f32 %v112, %v114
    %v116 = vadd.f32 %v112, %v115
    %vm117 = vweird.f32 %v111
    %vm118 = vweird.f32 %v112
    %vm119 = vmor %vm117, %vm118
    %v120 = vsel %vm119, %v112, %v116
    %v121 = vand.u32 2147483647, %v111
    %vm122 = vcmp.eq.f32.partialorder %v121, 8.507059e+37
    %v123 = vand.u32 %v111, 2147483648
    %v124 = vor.u32 1.1754944e-38, %v123
    %v125 = vsel %vm122, %v124, %v120
    %v126 = vmul.f32 1.0, %v125
    %v127 = vld [vmem:[%s3] sm:$0xff]
    %v128 = vld [vmem:[%s3 + $0x8] sm:$0xff]
    %v129 = vld [vmem:[%s3 + $0x10] sm:$0xf]
    %v130 = vld [vmem:[%s4] sm:$0x1]
    %v132 = vperm.slane %v130, 0
    %vm134 = vcmask 162816
    %v136 = vsel %vm134, %v126, 0
    %vm138 = vcmask 1043456
    %v140 = vsel %vm138, %v129, 0
    %142 = vmatpush.msra.mxu0 0.0
    %143 = vmatpush.msra.mxu0 0.0
    %144 = vmatpush.msra.mxu0 0.0
    %145 = vmatpush.msra.mxu0 0.0
    %146 = vmatpush.msra.mxu0 0.0
    %147 = vmatpush.msra.mxu0 0.0
    %148 = vmatpush.msra.mxu0 0.0
    %149 = vmatpush.msra.mxu0 0.0
    %150 = vmatpush.msra.mxu0 0.0
    %151 = vmatpush.msra.mxu0 0.0
    %152 = vmatpush.msra.mxu0 0.0
    %153 = vmatpush.msra.mxu0 0.0
    %154 = vmatpush.msra.mxu0 0.0
    %155 = vmatpush.msra.mxu0 %v140
    %156 = vmatpush.msra.mxu0 %v128
    %157 = vmatpush.msra.mxu0 %v127
    %158 = vmatmul.f32.gmra.mxu0 %v136
    %v159 = vpop.f32.mrf.mxu0
    %v160 = vadd.f32 %v132, %v159
    %161 = vdwg.mxu0
    %v162 = vxor.u32 %v160, 2147483648
    %v163 = vmul.f32 %v162, 1.442695
    %v164 = vpow.pop %v163
    %v165 = vadd.f32 %v164, 1.0
    %v166 = vrcp.pop %v165
    %v167 = vmul.f32 %v165, %v166
    %v168 = vsub.f32 1.0, %v167
    %v169 = vmul.f32 %v166, %v168
    %v170 = vadd.f32 %v166, %v169
    %vm171 = vweird.f32 %v165
    %vm172 = vweird.f32 %v166
    %vm173 = vmor %vm171, %vm172
    %v174 = vsel %vm173, %v166, %v170
    %v175 = vand.u32 2147483647, %v165
    %vm176 = vcmp.eq.f32.partialorder %v175, 8.507059e+37
    %v177 = vand.u32 %v165, 2147483648
    %v178 = vor.u32 1.1754944e-38, %v177
    %v179 = vsel %vm176, %v178, %v174
    %v180 = vmul.f32 1.0, %v179
    %v181 = vld [vmem:[%s5] sm:$0xff]
    %v182 = vld [vmem:[%s5 + $0x8] sm:$0x3]
    %v183 = vld [vmem:[%s6] sm:$0x1]
    %v185 = vperm.slane %v183, 0
    %vm187 = vcmask 80896
    %v189 = vsel %vm187, %v180, 0
    %vm191 = vcmask 1041408
    %v193 = vsel %vm191, %v182, 0
    %195 = vmatpush.msra.mxu0 0.0
    %196 = vmatpush.msra.mxu0 0.0
    %197 = vmatpush.msra.mxu0 0.0
    %198 = vmatpush.msra.mxu0 0.0
    %199 = vmatpush.msra.mxu0 0.0
    %200 = vmatpush.msra.mxu0 0.0
    %201 = vmatpush.msra.mxu0 0.0
    %202 = vmatpush.msra.mxu0 0.0
    %203 = vmatpush.msra.mxu0 0.0
    %204 = vmatpush.msra.mxu0 0.0
    %205 = vmatpush.msra.mxu0 0.0
    %206 = vmatpush.msra.mxu0 0.0
    %207 = vmatpush.msra.mxu0 0.0
    %208 = vmatpush.msra.mxu0 0.0
    %209 = vmatpush.msra.mxu0 %v193
    %210 = vmatpush.msra.mxu0 %v181
    %211 = vmatmul.f32.gmra.mxu0 %v189
    %v212 = vpop.f32.mrf.mxu0
    %v213 = vadd.f32 %v185, %v212
    %214 = vdwg.mxu0
    %v215 = vxor.u32 %v213, 2147483648
    %v216 = vmul.f32 %v215, 1.442695
    %v217 = vpow.pop %v216
    %v218 = vadd.f32 %v217, 1.0
    %v219 = vrcp.pop %v218
    %v220 = vmul.f32 %v218, %v219
    %v221 = vsub.f32 1.0, %v220
    %v222 = vmul.f32 %v219, %v221
    %v223 = vadd.f32 %v219, %v222
    %vm224 = vweird.f32 %v218
    %vm225 = vweird.f32 %v219
    %vm226 = vmor %vm224, %vm225
    %v227 = vsel %vm226, %v219, %v223
    %v228 = vand.u32 2147483647, %v218
    %vm229 = vcmp.eq.f32.partialorder %v228, 8.507059e+37
    %v230 = vand.u32 %v218, 2147483648
    %v231 = vor.u32 1.1754944e-38, %v230
    %v232 = vsel %vm229, %v231, %v227
    %v233 = vmul.f32 1.0, %v232
    %v234 = vld [vmem:[%s7] sm:$0xff]
    %v235 = vld [vmem:[%s7 + $0x8] sm:$0xff]
    %v236 = vld [vmem:[%s7 + $0x10] sm:$0xff]
    %v237 = vld [vmem:[%s7 + $0x18] sm:$0xff]
    %v238 = vld [vmem:[%s7 + $0x20] sm:$0xf]
    %v239 = vld [vmem:[%s7 + $0x28] sm:$0xf]
    %v240 = vld [vmem:[%s8] sm:$0x3]
    %v242 = vperm.slane %v240, 0
    %v243 = vperm.slane %v240, 1
    %v247 = vsel %vm134, %v233, 0
    %v250 = vsel %vm138, %v238, 0
    %v253 = vsel %vm138, %v239, 0
    %255 = vmatpush.msra.mxu0 0.0
    %256 = vmatpush.msra.mxu0 0.0
    %257 = vmatpush.msra.mxu0 0.0
    %258 = vmatpush.msra.mxu0 0.0
    %259 = vmatpush.msra.mxu0 0.0
    %260 = vmatpush.msra.mxu0 0.0
    %261 = vmatpush.msra.mxu0 0.0
    %262 = vmatpush.msra.mxu0 0.0
    %263 = vmatpush.msra.mxu0 0.0
    %264 = vmatpush.msra.mxu0 0.0
    %265 = vmatpush.msra.mxu0 0.0
    %266 = vmatpush.msra.mxu0 0.0
    %267 = vmatpush.msra.mxu0 0.0
    %268 = vmatpush.msra.mxu0 %v250
    %269 = vmatpush.msra.mxu0 %v236
    %270 = vmatpush.msra.mxu0 %v234
    %271 = vmatmul.f32.gmra.mxu0 %v247
    %v272 = vpop.f32.mrf.mxu0
    %v273 = vadd.f32 %v242, %v272
    %274 = vdwg.mxu0
    %275 = vmatpush.msra.mxu0 0.0
    %276 = vmatpush.msra.mxu0 0.0
    %277 = vmatpush.msra.mxu0 0.0
    %278 = vmatpush.msra.mxu0 0.0
    %279 = vmatpush.msra.mxu0 0.0
    %280 = vmatpush.msra.mxu0 0.0
    %281 = vmatpush.msra.mxu0 0.0
    %282 = vmatpush.msra.mxu0 0.0
    %283 = vmatpush.msra.mxu0 0.0
    %284 = vmatpush.msra.mxu0 0.0
    %285 = vmatpush.msra.mxu0 0.0
    %286 = vmatpush.msra.mxu0 0.0
    %287 = vmatpush.msra.mxu0 0.0
    %288 = vmatpush.msra.mxu0 %v253
    %289 = vmatpush.msra.mxu0 %v237
    %290 = vmatpush.msra.mxu0 %v235
    %291 = vmatmul.f32.gmra.mxu0 %v247
    %v292 = vpop.f32.mrf.mxu0
    %v293 = vadd.f32 %v243, %v292
    %294 = vdwg.mxu0
    %295 = vst [vmem:[#allocation2] sm:$0xff] %v273
    %296 = vst.msk [vmem:[#allocation2 + $0x8] sm:$0xff] %vm64, %v293
    // Predicated region
    $region38: #{tpu_custom_call.1} parent=1 // pred_check
      _
    $region39: #{tpu_custom_call.1} parent=1 // pred_check_branch
      %298 = sbr.rel (0) target = $region41
    $region40: #{tpu_custom_call.1} parent=1 // pred_region
      %300 = vsyncadd [#allocation3], 0
      %s302 = sshll.u32 [#allocation2], 4
      %s303 = int_to_ptr.vmem [resolvable:$true] %s302
      %s304 = sshll.u32 %s9, 4
      %s305 = int_to_ptr.hbm [resolvable:$true] %s304
      %307 = dma.vmem_to_hbm [thread:$0]  %s303, 256, %s305, [#allocation3]
    $region41: #{tpu_custom_call.1} parent=1 // pred_fallthru
      _
    // Predicated region
    $region42: #{tpu_custom_call.1} parent=1 // pred_check
      _
    $region43: #{tpu_custom_call.1} parent=1 // pred_check_branch
      %309 = sbr.rel (0) target = $region45
    $region44: #{tpu_custom_call.1} parent=1 // pred_region
      %311 = dma.done [#allocation3], 256
    $region45: #{tpu_custom_call.1} parent=1 // pred_fallthru
      _
    %312 = vsyncpa [#allocation3], 1

</llo_original>
